<compile_context>
chip_gen: v7x
topology: tpu7x:2x2x1
jax: 0.10.0
libtpu: 0.0.40
codegen_flags: <defaults>
</compile_context>

<pallas_src>
import math
import jax
import jax.numpy as jnp
from jax.experimental import pallas as pl
from jax.experimental.pallas import tpu as pltpu

# ----------------------------------------------------------------------------
# Module hyper-parameters (mirroring Decoder.__init__)
# ----------------------------------------------------------------------------
ENCODER_FEATURES = [8, 16, 32]
SIZES_DOWNSAMPLE = [64, 32, 16]
LATENT_SPACE = 16
BATCH = 2

DECODER_FEATURES = ENCODER_FEATURES[::-1]        # [32, 16, 8]
DECODER_FEATURES[-1] = DECODER_FEATURES[-2]      # [32, 16, 16]
SIZES_UPSAMPLE = SIZES_DOWNSAMPLE[::-1]          # [16, 32, 64]
SIZE_VIEW = SIZES_DOWNSAMPLE[-1]                 # 16
C0 = ENCODER_FEATURES[-1]                        # 32 channels after .view()
LIN_OUT = C0 * SIZE_VIEW                         # 512
L0 = SIZES_UPSAMPLE[0]                           # 16
L1 = SIZES_UPSAMPLE[1]                           # 32
L2 = SIZES_UPSAMPLE[2]                           # 64
C1 = DECODER_FEATURES[1]                         # 16
COUT = 3
KSZ = 3

# ----------------------------------------------------------------------------
# Packed-weight buffer layout: one (PACK_ROWS, 512) f32 slab, sliced at static
# offsets inside the kernel (single weight DMA instead of 8).
# ----------------------------------------------------------------------------
PACK_COLS = C1 * L1                              # 512
R_WF = 0                                         # (16, 512)   fused stage-0 W
R_BF = R_WF + LATENT_SPACE                       # (1, 512)    fused stage-0 b
R_WU1 = R_BF + 1                                 # (32, 64)    Wu1^T
R_BU1 = R_WU1 + L1                               # (1, 64)     bu1
R_WC1 = R_BU1 + 1                                # (16, 48)+(16,1) conv1 W | b
R_WLAST = R_WC1 + C1                             # (3, 48)+(3,1)  last  W | b
PACK_ROWS = ((R_WLAST + COUT + 7) // 8) * 8      # 72


# ----------------------------------------------------------------------------
# Kernel helpers
# ----------------------------------------------------------------------------
def _conv1d_batched(y, wf, bias, seam_first, seam_last):
    """k=3 'same' Conv1d on a (Ci, B*L) tile as ONE batched im2col matmul.

    y:          (Ci, B*L)   activations, batch concatenated along lanes
    wf:         (Co, 3*Ci)  tap-major folded weight, wf[o, k*Ci + c] = W[o, c, k]
    bias:       (Co, 1)
    seam_first: (Ci, B*L)   bool, True where (lane % L) == 0      (left pad)
    seam_last:  (Ci, B*L)   bool, True where (lane % L) == L - 1  (right pad)
    """
    Ci, BL = y.shape
    z = jnp.zeros((Ci, 1), jnp.float32)
    left = jnp.concatenate([z, y[:, :BL - 1]], axis=1)     # tap k=0: y[:, l-1]
    right = jnp.concatenate([y[:, 1:], z], axis=1)         # tap k=2: y[:, l+1]
    # Zero the per-batch segment boundaries so taps never bleed across the
    # batch seam (correctness concern #2 of the review).
    left = jnp.where(seam_first, 0.0, left)
    right = jnp.where(seam_last, 0.0, right)
    stack = jnp.concatenate([left, y, right], axis=0)      # (3*Ci, B*L)
    return jnp.dot(wf, stack, preferred_element_type=jnp.float32) + bias


# ----------------------------------------------------------------------------
# Kernel
# ----------------------------------------------------------------------------
def decoder_kernel(x_ref, w_ref, out_ref, m0_ref):
    B, c1, l1 = m0_ref.shape

    # Static slices of the single packed weight buffer.
    Wf = w_ref[R_WF:R_WF + LATENT_SPACE, :]                      # (16, 512)
    bf = w_ref[R_BF:R_BF + 1, :]                                 # (1, 512)
    Wu1T = w_ref[R_WU1:R_WU1 + L1, 0:L2]                         # (32, 64)
    bu1 = w_ref[R_BU1:R_BU1 + 1, 0:L2]                           # (1, 64)
    Wc1f = w_ref[R_WC1:R_WC1 + C1, 0:3 * C1]                     # (16, 48)
    bc1 = w_ref[R_WC1:R_WC1 + C1, 3 * C1:3 * C1 + 1]             # (16, 1)
    Wlastf = w_ref[R_WLAST:R_WLAST + COUT, 0:3 * C1]             # (3, 48)
    blast = w_ref[R_WLAST:R_WLAST + COUT, 3 * C1:3 * C1 + 1]     # (3, 1)

    # Stage 0 (fused affine): decoder_linear + view + Linear(16->32)
    # + Conv1d(32->16), folded offline into ONE matmul, then ReLU.
    h = jnp.dot(x_ref[...], Wf, preferred_element_type=jnp.float32) + bf
    h = jnp.maximum(h, 0.0)                                      # (B, C1*L1)

    # Irreducible `.view` relayout: C1*L1 lanes -> (C1 sublanes, L1 lanes).
    # TODO(synk): a (B,128)->(B,4,32) lane-splitting reshape would cut this to
    # 4 stores but is not reliably lowered by Mosaic; keep the proven 16 stores.
    for c in range(c1):
        m0_ref[:, c, :] = h[:, c * l1:(c + 1) * l1]

    # Stage 1: Linear(L1 -> L2) over the length dim, batched over all B*C1 rows
    # (ONE (32,32)@(32,64) push instead of a per-batch loop).
    lhs = jnp.concatenate([m0_ref[b] for b in range(B)], axis=0)       # (B*C1, L1)
    m1 = jnp.dot(lhs, Wu1T, preferred_element_type=jnp.float32) + bu1  # (B*C1, L2)

    # Move batch from sublanes to lanes: (B*C1, L2) -> (C1, B*L2) = (16, 128).
    y = jnp.concatenate([m1[b * c1:(b + 1) * c1, :] for b in range(B)], axis=1)

    # Per-batch conv edge masks on the concatenated lane axis (L2 is 2^k).
    lane = jax.lax.broadcasted_iota(jnp.int32, y.shape, 1)
    seam_first = (lane & (L2 - 1)) == 0
    seam_last = (lane & (L2 - 1)) == (L2 - 1)

    # Stage 2: Conv1d(C1 -> C1, k3, same) + ReLU — one batched im2col matmul.
    m2 = jnp.maximum(_conv1d_batched(y, Wc1f, bc1, seam_first, seam_last), 0.0)

    # Stage 3: last_conv Conv1d(C1 -> 3, k3, same) — one lane-dense store.
    out_ref[...] = _conv1d_batched(m2, Wlastf, blast, seam_first, seam_last)


# ----------------------------------------------------------------------------
# One-time, x-independent weight folding (pure weight algebra, HIGHEST prec)
# ----------------------------------------------------------------------------
def fold_decoder_params(params):
    (Wl, bl, Wu0, bu0, Wc0, bc0, Wu1, bu1, Wc1, bc1, Wlast, blast) = params
    dn = ("NCH", "OIH", "NCH")
    hp = jax.lax.Precision.HIGHEST

    # Fuse: Linear(latent->C0*L0) + view(C0,L0) + Linear(L0->L1) + Conv1d(C0->C1)
    WlR = Wl.reshape(C0, L0, LATENT_SPACE)                    # Wl[c*L0 + l, i]
    W1 = jnp.einsum("cli,jl->icj", WlR, Wu0, precision=hp)    # (latent, C0, L1)
    b1 = jnp.einsum("cl,jl->cj", bl.reshape(C0, L0), Wu0,
                    precision=hp) + bu0[None, :]
    Wf = jax.lax.conv_general_dilated(W1, Wc0, (1,), "SAME",
                                      dimension_numbers=dn, precision=hp)
    bf = jax.lax.conv_general_dilated(b1[None], Wc0, (1,), "SAME",
                                      dimension_numbers=dn,
                                      precision=hp)[0] + bc0[:, None]
    Wf = Wf.reshape(LATENT_SPACE, C1 * L1)                    # (16, 512)
    bf = bf.reshape(1, C1 * L1)                               # (1, 512)

    # Tap-major im2col folding of the remaining convs: wf[o, k*Ci + c] = W[o,c,k]
    Wc1f = jnp.transpose(Wc1, (0, 2, 1)).reshape(Wc1.shape[0], -1)        # (16, 48)
    Wlastf = jnp.transpose(Wlast, (0, 2, 1)).reshape(Wlast.shape[0], -1)  # (3, 48)

    return (Wf, bf, Wu1.T, bu1[None, :], Wc1f, bc1[:, None],
            Wlastf, blast[:, None])


def pack_decoder_params(params):
    """Fold + pack all decoder weights into ONE (72, 512) f32 buffer (1 DMA)."""
    Wf, bf, Wu1T, bu1, Wc1f, bc1, Wlastf, blast = fold_decoder_params(params)
    P = jnp.zeros((PACK_ROWS, PACK_COLS), jnp.float32)
    P = P.at[R_WF:R_WF + LATENT_SPACE, :].set(Wf)
    P = P.at[R_BF, :].set(bf[0])
    P = P.at[R_WU1:R_WU1 + L1, :L2].set(Wu1T)
    P = P.at[R_BU1, :L2].set(bu1[0])
    P = P.at[R_WC1:R_WC1 + C1, :3 * C1].set(Wc1f)
    P = P.at[R_WC1:R_WC1 + C1, 3 * C1].set(bc1[:, 0])
    P = P.at[R_WLAST:R_WLAST + COUT, :3 * C1].set(Wlastf)
    P = P.at[R_WLAST:R_WLAST + COUT, 3 * C1].set(blast[:, 0])
    return P


# ----------------------------------------------------------------------------
# Wrapper
# ----------------------------------------------------------------------------
def decoder_forward(x, w_pack):
    B = x.shape[0]
    out_flat = pl.pallas_call(
        decoder_kernel,
        out_shape=jax.ShapeDtypeStruct((COUT, B * L2), jnp.float32),
        grid=(1,),
        in_specs=[
            pl.BlockSpec((B, LATENT_SPACE), lambda i: (0, 0)),
            pl.BlockSpec((PACK_ROWS, PACK_COLS), lambda i: (0, 0)),
        ],
        out_specs=pl.BlockSpec((COUT, B * L2), lambda i: (0, 0)),
        scratch_shapes=[pltpu.VMEM((B, C1, L1), jnp.float32)],
        compiler_params=pltpu.CompilerParams(dimension_semantics=("arbitrary",)),
    )(x.astype(jnp.float32), w_pack.astype(jnp.float32))
    # (COUT, B*L2) -> (B, L2, COUT): batch split + permute(0, 2, 1) are pure
    # layout plumbing done outside the kernel so the kernel store stays
    # lane-dense (128 lanes, unmasked).
    return jnp.transpose(out_flat.reshape(COUT, B, L2), (1, 2, 0))


# ----------------------------------------------------------------------------
# Deterministic parameter init (PyTorch-default-style uniform bounds)
# ----------------------------------------------------------------------------
def init_params(key):
    def linear_init(k, out_f, in_f):
        kw, kb = jax.random.split(k)
        bound = 1.0 / math.sqrt(in_f)
        w = jax.random.uniform(kw, (out_f, in_f), jnp.float32, -bound, bound)
        b = jax.random.uniform(kb, (out_f,), jnp.float32, -bound, bound)
        return w, b

    def conv_init(k, out_c, in_c, ksz):
        kw, kb = jax.random.split(k)
        bound = 1.0 / math.sqrt(in_c * ksz)
        w = jax.random.uniform(kw, (out_c, in_c, ksz), jnp.float32, -bound, bound)
        b = jax.random.uniform(kb, (out_c,), jnp.float32, -bound, bound)
        return w, b

    ks = jax.random.split(key, 6)
    Wl, bl = linear_init(ks[0], LIN_OUT, LATENT_SPACE)                          # Linear(16, 512)
    Wu0, bu0 = linear_init(ks[1], L1, L0)                                       # Linear(16, 32)
    Wc0, bc0 = conv_init(ks[2], DECODER_FEATURES[1], DECODER_FEATURES[0], KSZ)  # Conv1d(32, 16, 3)
    Wu1, bu1 = linear_init(ks[3], L2, L1)                                       # Linear(32, 64)
    Wc1, bc1 = conv_init(ks[4], DECODER_FEATURES[2], DECODER_FEATURES[1], KSZ)  # Conv1d(16, 16, 3)
    Wlast, blast = conv_init(ks[5], COUT, DECODER_FEATURES[2], KSZ)             # Conv1d(16, 3, 3)
    return (Wl, bl, Wu0, bu0, Wc0, bc0, Wu1, bu1, Wc1, bc1, Wlast, blast)


# ----------------------------------------------------------------------------
# Pure-JAX reference (numerical check against the un-folded parameters)
# ----------------------------------------------------------------------------
def _conv1d_ref(x, w, b):  # x: (B, Ci, L) NCL ; w: (Co, Ci, K)
    y = jax.lax.conv_general_dilated(
        x, w, window_strides=(1,), padding="SAME",
        dimension_numbers=("NCH", "OIH", "NCH"))
    return y + b[None, :, None]


def decoder_reference(x, params):
    (Wl, bl, Wu0, bu0, Wc0, bc0, Wu1, bu1, Wc1, bc1, Wlast, blast) = params
    h = x @ Wl.T + bl
    h = h.reshape(x.shape[0], -1, SIZE_VIEW)
    h = h @ Wu0.T + bu0
    h = _conv1d_ref(h, Wc0, bc0)
    h = jnp.maximum(h, 0.0)
    h = h @ Wu1.T + bu1
    h = _conv1d_ref(h, Wc1, bc1)
    h = jnp.maximum(h, 0.0)
    h = _conv1d_ref(h, Wlast, blast)
    return jnp.transpose(h, (0, 2, 1))


if __name__ == "__main__":
    key = jax.random.PRNGKey(0)
    kx, kp = jax.random.split(key)
    x = jax.random.normal(kx, (BATCH, LATENT_SPACE), jnp.float32)
    params = init_params(kp)

    w_pack = pack_decoder_params(params)          # one-time fold + pack
    out = decoder_forward(x, w_pack)
    out = jax.block_until_ready(out)

    assert out.shape == (BATCH, L2, COUT), out.shape
    with jax.default_matmul_precision("highest"):
        ref = decoder_reference(x, params)
    err = float(jnp.max(jnp.abs(out - ref)))
    assert err < 1e-4, f"max abs err {err}"
    print("KERNEL_OK")
</pallas_src>

<mosaic_0001>
module attributes {stable_mosaic.version = 11 : i64} {
  func.func @decoder_kernel(%arg0: i32, %arg1: memref<2x16xf32, #tpu.memory_space<vmem>>, %arg2: memref<72x512xf32, #tpu.memory_space<vmem>>, %arg3: memref<3x128xf32, #tpu.memory_space<vmem>>, %arg4: memref<2x16x32xf32, #tpu.memory_space<vmem>>) attributes {dimension_semantics = [#tpu.dimension_semantics<arbitrary>], iteration_bounds = array<i64: 1>, scalar_prefetch = 0 : i64, scratch_operands = 1 : i64, tpu.core_type = #tpu.core_type<tc>, window_params = [{pipeline_mode = #tpu.pipeline_mode<synchronous>, transform_indices = @transform_0, window_bounds = array<i64: 2, 16>}, {pipeline_mode = #tpu.pipeline_mode<synchronous>, transform_indices = @transform_1, window_bounds = array<i64: 72, 512>}, {pipeline_mode = #tpu.pipeline_mode<synchronous>, transform_indices = @transform_2, window_bounds = array<i64: 3, 128>}]} {
    %c0 = arith.constant 0 : index
    %c0_0 = arith.constant 0 : index
    %0 = vector.load %arg2[%c0, %c0_0] : memref<72x512xf32, #tpu.memory_space<vmem>>, vector<16x512xf32>
    %c16 = arith.constant 16 : index
    %c0_1 = arith.constant 0 : index
    %1 = vector.load %arg2[%c16, %c0_1] : memref<72x512xf32, #tpu.memory_space<vmem>>, vector<1x512xf32>
    %c17 = arith.constant 17 : index
    %c0_2 = arith.constant 0 : index
    %2 = vector.load %arg2[%c17, %c0_2] : memref<72x512xf32, #tpu.memory_space<vmem>>, vector<32x64xf32>
    %c49 = arith.constant 49 : index
    %c0_3 = arith.constant 0 : index
    %3 = vector.load %arg2[%c49, %c0_3] : memref<72x512xf32, #tpu.memory_space<vmem>>, vector<1x64xf32>
    %c50 = arith.constant 50 : index
    %c0_4 = arith.constant 0 : index
    %4 = vector.load %arg2[%c50, %c0_4] : memref<72x512xf32, #tpu.memory_space<vmem>>, vector<16x48xf32>
    %c50_5 = arith.constant 50 : index
    %c48 = arith.constant 48 : index
    %5 = vector.load %arg2[%c50_5, %c48] : memref<72x512xf32, #tpu.memory_space<vmem>>, vector<16x1xf32>
    %c66 = arith.constant 66 : index
    %c0_6 = arith.constant 0 : index
    %6 = vector.load %arg2[%c66, %c0_6] : memref<72x512xf32, #tpu.memory_space<vmem>>, vector<3x48xf32>
    %c66_7 = arith.constant 66 : index
    %c48_8 = arith.constant 48 : index
    %7 = vector.load %arg2[%c66_7, %c48_8] : memref<72x512xf32, #tpu.memory_space<vmem>>, vector<3x1xf32>
    %c0_9 = arith.constant 0 : index
    %c0_10 = arith.constant 0 : index
    %8 = vector.load %arg1[%c0_9, %c0_10] : memref<2x16xf32, #tpu.memory_space<vmem>>, vector<2x16xf32>
    %cst = arith.constant dense<0.000000e+00> : vector<2x512xf32>
    %9 = tpu.matmul %8, %0, %cst {dimension_numbers = #tpu.dot_dimension_numbers<[1], [0], [0], [1], [0, 0, 1, 1], [], []>} : vector<2x16xf32>, vector<16x512xf32>, vector<2x512xf32> -> vector<2x512xf32>
    %10 = vector.broadcast %1 : vector<1x512xf32> to vector<2x512xf32>
    %11 = arith.addf %9, %10 : vector<2x512xf32>
    %cst_11 = arith.constant 0.000000e+00 : f32
    %12 = vector.broadcast %cst_11 : f32 to vector<2x512xf32>
    %13 = arith.maximumf %11, %12 : vector<2x512xf32>
    %14 = vector.extract_strided_slice %13 {offsets = [0, 0], sizes = [2, 32], strides = [1, 1]} : vector<2x512xf32> to vector<2x32xf32>
    %c0_12 = arith.constant 0 : index
    %c0_13 = arith.constant 0 : index
    %c0_14 = arith.constant 0 : index
    %15 = vector.load %arg4[%c0_12, %c0_13, %c0_14] : memref<2x16x32xf32, #tpu.memory_space<vmem>>, vector<2x1x32xf32>
    %16 = vector.shape_cast %15 : vector<2x1x32xf32> to vector<2x32xf32>
    %17 = vector.shape_cast %14 : vector<2x32xf32> to vector<2x1x32xf32>
    tpu.vector_store %arg4[%c0_12, %c0_13, %c0_14], %17 {strides = array<i32>} : memref<2x16x32xf32, #tpu.memory_space<vmem>>, vector<2x1x32xf32>,
    %18 = vector.extract_strided_slice %13 {offsets = [0, 32], sizes = [2, 32], strides = [1, 1]} : vector<2x512xf32> to vector<2x32xf32>
    %c0_15 = arith.constant 0 : index
    %c1 = arith.constant 1 : index
    %c0_16 = arith.constant 0 : index
    %19 = vector.load %arg4[%c0_15, %c1, %c0_16] : memref<2x16x32xf32, #tpu.memory_space<vmem>>, vector<2x1x32xf32>
    %20 = vector.shape_cast %19 : vector<2x1x32xf32> to vector<2x32xf32>
    %21 = vector.shape_cast %18 : vector<2x32xf32> to vector<2x1x32xf32>
    tpu.vector_store %arg4[%c0_15, %c1, %c0_16], %21 {strides = array<i32>} : memref<2x16x32xf32, #tpu.memory_space<vmem>>, vector<2x1x32xf32>,
    %22 = vector.extract_strided_slice %13 {offsets = [0, 64], sizes = [2, 32], strides = [1, 1]} : vector<2x512xf32> to vector<2x32xf32>
    %c0_17 = arith.constant 0 : index
    %c2 = arith.constant 2 : index
    %c0_18 = arith.constant 0 : index
    %23 = vector.load %arg4[%c0_17, %c2, %c0_18] : memref<2x16x32xf32, #tpu.memory_space<vmem>>, vector<2x1x32xf32>
    %24 = vector.shape_cast %23 : vector<2x1x32xf32> to vector<2x32xf32>
    %25 = vector.shape_cast %22 : vector<2x32xf32> to vector<2x1x32xf32>
    tpu.vector_store %arg4[%c0_17, %c2, %c0_18], %25 {strides = array<i32>} : memref<2x16x32xf32, #tpu.memory_space<vmem>>, vector<2x1x32xf32>,
    %26 = vector.extract_strided_slice %13 {offsets = [0, 96], sizes = [2, 32], strides = [1, 1]} : vector<2x512xf32> to vector<2x32xf32>
    %c0_19 = arith.constant 0 : index
    %c3 = arith.constant 3 : index
    %c0_20 = arith.constant 0 : index
    %27 = vector.load %arg4[%c0_19, %c3, %c0_20] : memref<2x16x32xf32, #tpu.memory_space<vmem>>, vector<2x1x32xf32>
    %28 = vector.shape_cast %27 : vector<2x1x32xf32> to vector<2x32xf32>
    %29 = vector.shape_cast %26 : vector<2x32xf32> to vector<2x1x32xf32>
    tpu.vector_store %arg4[%c0_19, %c3, %c0_20], %29 {strides = array<i32>} : memref<2x16x32xf32, #tpu.memory_space<vmem>>, vector<2x1x32xf32>,
    %30 = vector.extract_strided_slice %13 {offsets = [0, 128], sizes = [2, 32], strides = [1, 1]} : vector<2x512xf32> to vector<2x32xf32>
    %c0_21 = arith.constant 0 : index
    %c4 = arith.constant 4 : index
    %c0_22 = arith.constant 0 : index
    %31 = vector.load %arg4[%c0_21, %c4, %c0_22] : memref<2x16x32xf32, #tpu.memory_space<vmem>>, vector<2x1x32xf32>
    %32 = vector.shape_cast %31 : vector<2x1x32xf32> to vector<2x32xf32>
    %33 = vector.shape_cast %30 : vector<2x32xf32> to vector<2x1x32xf32>
    tpu.vector_store %arg4[%c0_21, %c4, %c0_22], %33 {strides = array<i32>} : memref<2x16x32xf32, #tpu.memory_space<vmem>>, vector<2x1x32xf32>,
    %34 = vector.extract_strided_slice %13 {offsets = [0, 160], sizes = [2, 32], strides = [1, 1]} : vector<2x512xf32> to vector<2x32xf32>
    %c0_23 = arith.constant 0 : index
    %c5 = arith.constant 5 : index
    %c0_24 = arith.constant 0 : index
    %35 = vector.load %arg4[%c0_23, %c5, %c0_24] : memref<2x16x32xf32, #tpu.memory_space<vmem>>, vector<2x1x32xf32>
    %36 = vector.shape_cast %35 : vector<2x1x32xf32> to vector<2x32xf32>
    %37 = vector.shape_cast %34 : vector<2x32xf32> to vector<2x1x32xf32>
    tpu.vector_store %arg4[%c0_23, %c5, %c0_24], %37 {strides = array<i32>} : memref<2x16x32xf32, #tpu.memory_space<vmem>>, vector<2x1x32xf32>,
    %38 = vector.extract_strided_slice %13 {offsets = [0, 192], sizes = [2, 32], strides = [1, 1]} : vector<2x512xf32> to vector<2x32xf32>
    %c0_25 = arith.constant 0 : index
    %c6 = arith.constant 6 : index
    %c0_26 = arith.constant 0 : index
    %39 = vector.load %arg4[%c0_25, %c6, %c0_26] : memref<2x16x32xf32, #tpu.memory_space<vmem>>, vector<2x1x32xf32>
    %40 = vector.shape_cast %39 : vector<2x1x32xf32> to vector<2x32xf32>
    %41 = vector.shape_cast %38 : vector<2x32xf32> to vector<2x1x32xf32>
    tpu.vector_store %arg4[%c0_25, %c6, %c0_26], %41 {strides = array<i32>} : memref<2x16x32xf32, #tpu.memory_space<vmem>>, vector<2x1x32xf32>,
    %42 = vector.extract_strided_slice %13 {offsets = [0, 224], sizes = [2, 32], strides = [1, 1]} : vector<2x512xf32> to vector<2x32xf32>
    %c0_27 = arith.constant 0 : index
    %c7 = arith.constant 7 : index
    %c0_28 = arith.constant 0 : index
    %43 = vector.load %arg4[%c0_27, %c7, %c0_28] : memref<2x16x32xf32, #tpu.memory_space<vmem>>, vector<2x1x32xf32>
    %44 = vector.shape_cast %43 : vector<2x1x32xf32> to vector<2x32xf32>
    %45 = vector.shape_cast %42 : vector<2x32xf32> to vector<2x1x32xf32>
    tpu.vector_store %arg4[%c0_27, %c7, %c0_28], %45 {strides = array<i32>} : memref<2x16x32xf32, #tpu.memory_space<vmem>>, vector<2x1x32xf32>,
    %46 = vector.extract_strided_slice %13 {offsets = [0, 256], sizes = [2, 32], strides = [1, 1]} : vector<2x512xf32> to vector<2x32xf32>
    %c0_29 = arith.constant 0 : index
    %c8 = arith.constant 8 : index
    %c0_30 = arith.constant 0 : index
    %47 = vector.load %arg4[%c0_29, %c8, %c0_30] : memref<2x16x32xf32, #tpu.memory_space<vmem>>, vector<2x1x32xf32>
    %48 = vector.shape_cast %47 : vector<2x1x32xf32> to vector<2x32xf32>
    %49 = vector.shape_cast %46 : vector<2x32xf32> to vector<2x1x32xf32>
    tpu.vector_store %arg4[%c0_29, %c8, %c0_30], %49 {strides = array<i32>} : memref<2x16x32xf32, #tpu.memory_space<vmem>>, vector<2x1x32xf32>,
    %50 = vector.extract_strided_slice %13 {offsets = [0, 288], sizes = [2, 32], strides = [1, 1]} : vector<2x512xf32> to vector<2x32xf32>
    %c0_31 = arith.constant 0 : index
    %c9 = arith.constant 9 : index
    %c0_32 = arith.constant 0 : index
    %51 = vector.load %arg4[%c0_31, %c9, %c0_32] : memref<2x16x32xf32, #tpu.memory_space<vmem>>, vector<2x1x32xf32>
    %52 = vector.shape_cast %51 : vector<2x1x32xf32> to vector<2x32xf32>
    %53 = vector.shape_cast %50 : vector<2x32xf32> to vector<2x1x32xf32>
    tpu.vector_store %arg4[%c0_31, %c9, %c0_32], %53 {strides = array<i32>} : memref<2x16x32xf32, #tpu.memory_space<vmem>>, vector<2x1x32xf32>,
    %54 = vector.extract_strided_slice %13 {offsets = [0, 320], sizes = [2, 32], strides = [1, 1]} : vector<2x512xf32> to vector<2x32xf32>
    %c0_33 = arith.constant 0 : index
    %c10 = arith.constant 10 : index
    %c0_34 = arith.constant 0 : index
    %55 = vector.load %arg4[%c0_33, %c10, %c0_34] : memref<2x16x32xf32, #tpu.memory_space<vmem>>, vector<2x1x32xf32>
    %56 = vector.shape_cast %55 : vector<2x1x32xf32> to vector<2x32xf32>
    %57 = vector.shape_cast %54 : vector<2x32xf32> to vector<2x1x32xf32>
    tpu.vector_store %arg4[%c0_33, %c10, %c0_34], %57 {strides = array<i32>} : memref<2x16x32xf32, #tpu.memory_space<vmem>>, vector<2x1x32xf32>,
    %58 = vector.extract_strided_slice %13 {offsets = [0, 352], sizes = [2, 32], strides = [1, 1]} : vector<2x512xf32> to vector<2x32xf32>
    %c0_35 = arith.constant 0 : index
    %c11 = arith.constant 11 : index
    %c0_36 = arith.constant 0 : index
    %59 = vector.load %arg4[%c0_35, %c11, %c0_36] : memref<2x16x32xf32, #tpu.memory_space<vmem>>, vector<2x1x32xf32>
    %60 = vector.shape_cast %59 : vector<2x1x32xf32> to vector<2x32xf32>
    %61 = vector.shape_cast %58 : vector<2x32xf32> to vector<2x1x32xf32>
    tpu.vector_store %arg4[%c0_35, %c11, %c0_36], %61 {strides = array<i32>} : memref<2x16x32xf32, #tpu.memory_space<vmem>>, vector<2x1x32xf32>,
    %62 = vector.extract_strided_slice %13 {offsets = [0, 384], sizes = [2, 32], strides = [1, 1]} : vector<2x512xf32> to vector<2x32xf32>
    %c0_37 = arith.constant 0 : index
    %c12 = arith.constant 12 : index
    %c0_38 = arith.constant 0 : index
    %63 = vector.load %arg4[%c0_37, %c12, %c0_38] : memref<2x16x32xf32, #tpu.memory_space<vmem>>, vector<2x1x32xf32>
    %64 = vector.shape_cast %63 : vector<2x1x32xf32> to vector<2x32xf32>
    %65 = vector.shape_cast %62 : vector<2x32xf32> to vector<2x1x32xf32>
    tpu.vector_store %arg4[%c0_37, %c12, %c0_38], %65 {strides = array<i32>} : memref<2x16x32xf32, #tpu.memory_space<vmem>>, vector<2x1x32xf32>,
    %66 = vector.extract_strided_slice %13 {offsets = [0, 416], sizes = [2, 32], strides = [1, 1]} : vector<2x512xf32> to vector<2x32xf32>
    %c0_39 = arith.constant 0 : index
    %c13 = arith.constant 13 : index
    %c0_40 = arith.constant 0 : index
    %67 = vector.load %arg4[%c0_39, %c13, %c0_40] : memref<2x16x32xf32, #tpu.memory_space<vmem>>, vector<2x1x32xf32>
    %68 = vector.shape_cast %67 : vector<2x1x32xf32> to vector<2x32xf32>
    %69 = vector.shape_cast %66 : vector<2x32xf32> to vector<2x1x32xf32>
    tpu.vector_store %arg4[%c0_39, %c13, %c0_40], %69 {strides = array<i32>} : memref<2x16x32xf32, #tpu.memory_space<vmem>>, vector<2x1x32xf32>,
    %70 = vector.extract_strided_slice %13 {offsets = [0, 448], sizes = [2, 32], strides = [1, 1]} : vector<2x512xf32> to vector<2x32xf32>
    %c0_41 = arith.constant 0 : index
    %c14 = arith.constant 14 : index
    %c0_42 = arith.constant 0 : index
    %71 = vector.load %arg4[%c0_41, %c14, %c0_42] : memref<2x16x32xf32, #tpu.memory_space<vmem>>, vector<2x1x32xf32>
    %72 = vector.shape_cast %71 : vector<2x1x32xf32> to vector<2x32xf32>
    %73 = vector.shape_cast %70 : vector<2x32xf32> to vector<2x1x32xf32>
    tpu.vector_store %arg4[%c0_41, %c14, %c0_42], %73 {strides = array<i32>} : memref<2x16x32xf32, #tpu.memory_space<vmem>>, vector<2x1x32xf32>,
    %74 = vector.extract_strided_slice %13 {offsets = [0, 480], sizes = [2, 32], strides = [1, 1]} : vector<2x512xf32> to vector<2x32xf32>
    %c0_43 = arith.constant 0 : index
    %c15 = arith.constant 15 : index
    %c0_44 = arith.constant 0 : index
    %75 = vector.load %arg4[%c0_43, %c15, %c0_44] : memref<2x16x32xf32, #tpu.memory_space<vmem>>, vector<2x1x32xf32>
    %76 = vector.shape_cast %75 : vector<2x1x32xf32> to vector<2x32xf32>
    %77 = vector.shape_cast %74 : vector<2x32xf32> to vector<2x1x32xf32>
    tpu.vector_store %arg4[%c0_43, %c15, %c0_44], %77 {strides = array<i32>} : memref<2x16x32xf32, #tpu.memory_space<vmem>>, vector<2x1x32xf32>,
    %c0_45 = arith.constant 0 : index
    %c0_46 = arith.constant 0 : index
    %c0_47 = arith.constant 0 : index
    %78 = vector.load %arg4[%c0_45, %c0_46, %c0_47] : memref<2x16x32xf32, #tpu.memory_space<vmem>>, vector<1x16x32xf32>
    %79 = vector.shape_cast %78 : vector<1x16x32xf32> to vector<16x32xf32>
    %c1_48 = arith.constant 1 : index
    %c0_49 = arith.constant 0 : index
    %c0_50 = arith.constant 0 : index
    %80 = vector.load %arg4[%c1_48, %c0_49, %c0_50] : memref<2x16x32xf32, #tpu.memory_space<vmem>>, vector<1x16x32xf32>
    %81 = vector.shape_cast %80 : vector<1x16x32xf32> to vector<16x32xf32>
    %82 = tpu.concatenate %79, %81 in 0 : vector<16x32xf32>, vector<16x32xf32> -> vector<32x32xf32>
    %cst_51 = arith.constant dense<0.000000e+00> : vector<32x64xf32>
    %83 = tpu.matmul %82, %2, %cst_51 {dimension_numbers = #tpu.dot_dimension_numbers<[1], [0], [0], [1], [0, 0, 1, 1], [], []>} : vector<32x32xf32>, vector<32x64xf32>, vector<32x64xf32> -> vector<32x64xf32>
    %84 = vector.broadcast %3 : vector<1x64xf32> to vector<32x64xf32>
    %85 = arith.addf %83, %84 : vector<32x64xf32>
    %86 = vector.extract_strided_slice %85 {offsets = [0, 0], sizes = [16, 64], strides = [1, 1]} : vector<32x64xf32> to vector<16x64xf32>
    %87 = vector.extract_strided_slice %85 {offsets = [16, 0], sizes = [16, 64], strides = [1, 1]} : vector<32x64xf32> to vector<16x64xf32>
    %88 = tpu.concatenate %86, %87 in 1 : vector<16x64xf32>, vector<16x64xf32> -> vector<16x128xf32>
    %89 = tpu.iota {dimensions = array<i32: 1>} : vector<16x128xi32>
    %c63_i32 = arith.constant 63 : i32
    %90 = vector.broadcast %c63_i32 : i32 to vector<16x128xi32>
    %91 = arith.andi %89, %90 : vector<16x128xi32>
    %c0_i32 = arith.constant 0 : i32
    %92 = vector.broadcast %c0_i32 : i32 to vector<16x128xi32>
    %93 = arith.cmpi eq, %91, %92 : vector<16x128xi32>
    %c63_i32_52 = arith.constant 63 : i32
    %94 = vector.broadcast %c63_i32_52 : i32 to vector<16x128xi32>
    %95 = arith.andi %89, %94 : vector<16x128xi32>
    %c63_i32_53 = arith.constant 63 : i32
    %96 = vector.broadcast %c63_i32_53 : i32 to vector<16x128xi32>
    %97 = arith.cmpi eq, %95, %96 : vector<16x128xi32>
    %cst_54 = arith.constant 0.000000e+00 : f32
    %98 = vector.broadcast %cst_54 : f32 to vector<16x1xf32>
    %99 = vector.extract_strided_slice %88 {offsets = [0, 0], sizes = [16, 127], strides = [1, 1]} : vector<16x128xf32> to vector<16x127xf32>
    %100 = tpu.concatenate %98, %99 in 1 : vector<16x1xf32>, vector<16x127xf32> -> vector<16x128xf32>
    %101 = vector.extract_strided_slice %88 {offsets = [0, 1], sizes = [16, 127], strides = [1, 1]} : vector<16x128xf32> to vector<16x127xf32>
    %102 = tpu.concatenate %101, %98 in 1 : vector<16x127xf32>, vector<16x1xf32> -> vector<16x128xf32>
    %cst_55 = arith.constant 0.000000e+00 : f32
    %103 = vector.broadcast %cst_55 : f32 to vector<16x128xf32>
    %104 = arith.select %93, %103, %100 : vector<16x128xi1>, vector<16x128xf32>
    %cst_56 = arith.constant 0.000000e+00 : f32
    %105 = vector.broadcast %cst_56 : f32 to vector<16x128xf32>
    %106 = arith.select %97, %105, %102 : vector<16x128xi1>, vector<16x128xf32>
    %107 = tpu.concatenate %104, %88, %106 in 0 : vector<16x128xf32>, vector<16x128xf32>, vector<16x128xf32> -> vector<48x128xf32>
    %cst_57 = arith.constant dense<0.000000e+00> : vector<16x128xf32>
    %108 = tpu.matmul %4, %107, %cst_57 {dimension_numbers = #tpu.dot_dimension_numbers<[1], [0], [0], [1], [0, 0, 1, 1], [], []>} : vector<16x48xf32>, vector<48x128xf32>, vector<16x128xf32> -> vector<16x128xf32>
    %109 = vector.broadcast %5 : vector<16x1xf32> to vector<16x128xf32>
    %110 = arith.addf %108, %109 : vector<16x128xf32>
    %cst_58 = arith.constant 0.000000e+00 : f32
    %111 = vector.broadcast %cst_58 : f32 to vector<16x128xf32>
    %112 = arith.maximumf %110, %111 : vector<16x128xf32>
    %cst_59 = arith.constant 0.000000e+00 : f32
    %113 = vector.broadcast %cst_59 : f32 to vector<16x1xf32>
    %114 = vector.extract_strided_slice %112 {offsets = [0, 0], sizes = [16, 127], strides = [1, 1]} : vector<16x128xf32> to vector<16x127xf32>
    %115 = tpu.concatenate %113, %114 in 1 : vector<16x1xf32>, vector<16x127xf32> -> vector<16x128xf32>
    %116 = vector.extract_strided_slice %112 {offsets = [0, 1], sizes = [16, 127], strides = [1, 1]} : vector<16x128xf32> to vector<16x127xf32>
    %117 = tpu.concatenate %116, %113 in 1 : vector<16x127xf32>, vector<16x1xf32> -> vector<16x128xf32>
    %cst_60 = arith.constant 0.000000e+00 : f32
    %118 = vector.broadcast %cst_60 : f32 to vector<16x128xf32>
    %119 = arith.select %93, %118, %115 : vector<16x128xi1>, vector<16x128xf32>
    %cst_61 = arith.constant 0.000000e+00 : f32
    %120 = vector.broadcast %cst_61 : f32 to vector<16x128xf32>
    %121 = arith.select %97, %120, %117 : vector<16x128xi1>, vector<16x128xf32>
    %122 = tpu.concatenate %119, %112, %121 in 0 : vector<16x128xf32>, vector<16x128xf32>, vector<16x128xf32> -> vector<48x128xf32>
    %cst_62 = arith.constant dense<0.000000e+00> : vector<3x128xf32>
    %123 = tpu.matmul %6, %122, %cst_62 {dimension_numbers = #tpu.dot_dimension_numbers<[1], [0], [0], [1], [0, 0, 1, 1], [], []>} : vector<3x48xf32>, vector<48x128xf32>, vector<3x128xf32> -> vector<3x128xf32>
    %124 = vector.broadcast %7 : vector<3x1xf32> to vector<3x128xf32>
    %125 = arith.addf %123, %124 : vector<3x128xf32>
    %c0_63 = arith.constant 0 : index
    %c0_64 = arith.constant 0 : index
    %126 = vector.load %arg3[%c0_63, %c0_64] : memref<3x128xf32, #tpu.memory_space<vmem>>, vector<3x128xf32>
    tpu.vector_store %arg3[%c0_63, %c0_64], %125 {strides = array<i32>} : memref<3x128xf32, #tpu.memory_space<vmem>>, vector<3x128xf32>,
    return
  }
  func.func @transform_0(%arg0: i32) -> (i32, i32) {
    %c0_i32 = arith.constant 0 : i32
    %c0_i32_0 = arith.constant 0 : i32
    %c0_i32_1 = arith.constant 0 : i32
    return %c0_i32, %c0_i32_0 : i32, i32
  }
  func.func @transform_1(%arg0: i32) -> (i32, i32) {
    %c0_i32 = arith.constant 0 : i32
    %c0_i32_0 = arith.constant 0 : i32
    %c0_i32_1 = arith.constant 0 : i32
    return %c0_i32, %c0_i32_0 : i32, i32
  }
  func.func @transform_2(%arg0: i32) -> (i32, i32) {
    %c0_i32 = arith.constant 0 : i32
    %c0_i32_0 = arith.constant 0 : i32
    %c0_i32_1 = arith.constant 0 : i32
    return %c0_i32, %c0_i32_0 : i32, i32
  }
}

</mosaic_0001>

<llo_original>
// kernel: tpu_custom_call.1
$region0: #{tpu_custom_call.1}
  #allocation0 [shape = 'u32[]', space=smem, size = 0x4, offset = 0x4, fixed_abs, tag = 'smem constant byte address 0x4 - core index']
  #allocation1 [shape = 'u32[144,128]{1,0:T(1,128)}', space=vmem, size = 0x12000, scoped, tag = 'internal scratch']
  #allocation2 [shape = 'f32[2,16,32]{2,1,0:T(8,128)}', space=vmem, size = 0x4000, scoped, tag = 'scratch operand']
  %s0 = inlined_call_operand.hbm [shape: f32[2,16], index: 0, kind: input, shape index: {}]
  %s1 = inlined_call_operand.hbm [shape: f32[72,512], index: 1, kind: input, shape index: {}]
  %s2 = inlined_call_operand.hbm [shape: f32[3,128], index: 2, kind: output, shape index: {}]
  %s3 = sld [smem:[#allocation0]]
  $region26: #{tpu_custom_call.1} parent=0
    _
  %s5 = ssub.s32 1, %s3
  %s6 = scalar_select 0, %s5, %s3
  $region1: #{tpu_custom_call.1} parent=0
    #allocation3 [shape = 'u8[1024]{0}', space=vmem, size = 0x400, scoped, tag = 'input window, operand 0, single buffered']
    #allocation4 [shape = 's32[1]{0}', space=sflag, size = 0x4, scoped, tag = 'scoped memory for tpu_custom_call.1']
    #allocation5 [shape = 's32[1]{0}', space=sflag, size = 0x4, scoped, tag = 'scoped memory for tpu_custom_call.1']
    #allocation6 [shape = 'u8[147456]{0}', space=vmem, size = 0x24000, scoped, tag = 'input window, operand 1, single buffered']
    #allocation7 [shape = 's32[1]{0}', space=sflag, size = 0x4, scoped, tag = 'scoped memory for tpu_custom_call.1']
    #allocation8 [shape = 'u8[2048]{0}', space=vmem, size = 0x800, scoped, tag = 'output window, operand 0, single buffered']
    %7 = vsyncpa [#allocation4], 0
    %8 = vsyncpa [#allocation7], 0
    %9 = vsyncpa [#allocation5], 0
    // Predicated region
    $region2: #{tpu_custom_call.1} parent=1 // pred_check
      _
    $region3: #{tpu_custom_call.1} parent=1 // pred_check_branch
      %11 = sbr.rel (0) target = $region5
    $region4: #{tpu_custom_call.1} parent=1 // pred_region
      %s13 = ssub.s32 32, 32
      %14 = vsyncadd [#allocation4], %s13
      %s16 = sshll.u32 [#allocation3], 4
      %s17 = int_to_ptr.vmem [resolvable:$true] %s16
      %19 = dma.hbm_to_vmem [thread:$0]  %s0, 32, %s17, [#allocation4]
    $region5: #{tpu_custom_call.1} parent=1 // pred_fallthru
      _
    // Predicated region
    $region6: #{tpu_custom_call.1} parent=1 // pred_check
      _
    $region7: #{tpu_custom_call.1} parent=1 // pred_check_branch
      %21 = sbr.rel (0) target = $region9
    $region8: #{tpu_custom_call.1} parent=1 // pred_region
      %s23 = ssub.s32 4608, 4608
      %24 = vsyncadd [#allocation7], %s23
      %s25 = sshll.u32 [#allocation6], 4
      %s26 = int_to_ptr.vmem [resolvable:$true] %s25
      %31 = dma.hbm_to_vmem [thread:$0]  %s1, 4608, %s26, [#allocation7], 512, 512, 32
    $region9: #{tpu_custom_call.1} parent=1 // pred_fallthru
      _
    // Predicated region
    $region10: #{tpu_custom_call.1} parent=1 // pred_check
      _
    $region11: #{tpu_custom_call.1} parent=1 // pred_check_branch
      %33 = sbr.rel (0) target = $region13
    $region12: #{tpu_custom_call.1} parent=1 // pred_region
      %34 = dma.done [#allocation4], 32
    $region13: #{tpu_custom_call.1} parent=1 // pred_fallthru
      _
    // Predicated region
    $region14: #{tpu_custom_call.1} parent=1 // pred_check
      _
    $region15: #{tpu_custom_call.1} parent=1 // pred_check_branch
      %36 = sbr.rel (0) target = $region17
    $region16: #{tpu_custom_call.1} parent=1 // pred_region
      %37 = dma.done [#allocation7], 4608
    $region17: #{tpu_custom_call.1} parent=1 // pred_fallthru
      _
    %v38 = vld [vmem:[#allocation6] sm:$0xff]
    %v39 = vld [vmem:[#allocation6 + $0x8] sm:$0xff]
    %v40 = vld [vmem:[#allocation6 + $0x10] sm:$0xff]
    %v41 = vld [vmem:[#allocation6 + $0x18] sm:$0xff]
    %v42 = vld [vmem:[#allocation6 + $0x20] sm:$0xff]
    %v43 = vld [vmem:[#allocation6 + $0x28] sm:$0xff]
    %v44 = vld [vmem:[#allocation6 + $0x30] sm:$0xff]
    %v45 = vld [vmem:[#allocation6 + $0x38] sm:$0xff]
    %s46 = scalar_lea.vmem [#allocation6], 64
    %v47 = vld [vmem:[%s46] ss:$8 sm:$0xf]
    %v48 = vld [vmem:[#allocation6 + $0x40] sm:$0xfe]
    %v49 = vld [vmem:[#allocation6 + $0x60] sm:$0xff]
    %v50 = vld [vmem:[#allocation6 + $0x80] sm:$0xff]
    %v51 = vld [vmem:[#allocation6 + $0xa0] sm:$0xff]
    %v52 = vld [vmem:[#allocation6 + $0xc0] sm:$0x1]
    %v53 = vld [vmem:[#allocation6 + $0xc1] ss:$0 sm:$0xff]
    %v54 = vld [vmem:[#allocation6 + $0xc0] sm:$0xfc]
    %v55 = vld [vmem:[#allocation6 + $0xe0] sm:$0xff]
    %v56 = vld [vmem:[#allocation6 + $0x100] sm:$0x3]
    %v57 = vld [vmem:[#allocation6 + $0x100] sm:$0x1c]
    %v58 = vld [vmem:[#allocation3] sm:$0x3]
    %v60 = vlaneseq
    %v61 = vshrl.u32 %v60, 7
    %v62 = vsub.s32 0, %v61
    %v63 = vrot.slane %v47, %v62
    %v64 = vlaneseq
    %v65 = vshrl.u32 %v64, 7
    %v66 = vsub.s32 1, %v65
    %v67 = vrot.slane %v47, %v66
    %v68 = vlaneseq
    %v69 = vshrl.u32 %v68, 7
    %v70 = vsub.s32 2, %v69
    %v71 = vrot.slane %v47, %v70
    %v72 = vlaneseq
    %v73 = vshrl.u32 %v72, 7
    %v74 = vsub.s32 3, %v73
    %v75 = vrot.slane %v47, %v74
    %vm80 = vcmask 130048
    %v82 = vsel %vm80, %v58, 0
    %84 = vmatprep.subr.mxu0 %v39
    %85 = vmatpush1.msra.mxu0 %v38
    %86 = vmatprep.subr.mxu0 %v43
    %87 = vmatpush1.msra.mxu0 %v42
    %88 = vmatprep.subr.mxu0 0.0
    %89 = vmatpush1.msra.mxu0 0.0
    %90 = vmatprep.subr.mxu0 0.0
    %91 = vmatpush1.msra.mxu0 0.0
    %92 = vmatprep.subr.mxu0 0.0
    %93 = vmatpush1.msra.mxu0 0.0
    %94 = vmatprep.subr.mxu0 0.0
    %95 = vmatpush1.msra.mxu0 0.0
    %96 = vmatprep.subr.mxu0 0.0
    %97 = vmatpush1.msra.mxu0 0.0
    %98 = vmatprep.subr.mxu0 0.0
    %99 = vmatpush1.msra.mxu0 0.0
    %100 = vmatprep.subr.mxu0 0.0
    %101 = vmatpush1.msra.mxu0 0.0
    %102 = vmatprep.subr.mxu0 0.0
    %103 = vmatpush1.msra.mxu0 0.0
    %104 = vmatprep.subr.mxu0 0.0
    %105 = vmatpush1.msra.mxu0 0.0
    %106 = vmatprep.subr.mxu0 0.0
    %107 = vmatpush1.msra.mxu0 0.0
    %108 = vmatprep.subr.mxu0 0.0
    %109 = vmatpush1.msra.mxu0 0.0
    %110 = vmatprep.subr.mxu0 0.0
    %111 = vmatpush1.msra.mxu0 0.0
    %112 = vmatprep.subr.mxu0 0.0
    %113 = vmatpush1.msra.mxu0 0.0
    %114 = vmatprep.subr.mxu0 0.0
    %115 = vmatpush1.msra.mxu0 0.0
    %116 = vmatprep.subr.mxu0 0.0
    %117 = vmatpush1.msra.mxu0 0.0
    %118 = vmatprep.subr.mxu0 0.0
    %119 = vmatpush1.msra.mxu0 0.0
    %120 = vmatprep.subr.mxu0 0.0
    %121 = vmatpush1.msra.mxu0 0.0
    %122 = vmatprep.subr.mxu0 0.0
    %123 = vmatpush1.msra.mxu0 0.0
    %124 = vmatprep.subr.mxu0 0.0
    %125 = vmatpush1.msra.mxu0 0.0
    %126 = vmatprep.subr.mxu0 0.0
    %127 = vmatpush1.msra.mxu0 0.0
    %128 = vmatprep.subr.mxu0 0.0
    %129 = vmatpush1.msra.mxu0 0.0
    %130 = vmatprep.subr.mxu0 0.0
    %131 = vmatpush1.msra.mxu0 0.0
    %132 = vmatprep.subr.mxu0 0.0
    %133 = vmatpush1.msra.mxu0 0.0
    %134 = vmatprep.subr.mxu0 0.0
    %135 = vmatpush1.msra.mxu0 0.0
    %136 = vmatprep.subr.mxu0 0.0
    %137 = vmatpush1.msra.mxu0 0.0
    %138 = vmatprep.subr.mxu0 0.0
    %139 = vmatpush1.msra.mxu0 0.0
    %140 = vmatprep.subr.mxu0 0.0
    %141 = vmatpush1.msra.mxu0 0.0
    %142 = vmatprep.subr.mxu0 0.0
    %143 = vmatpush1.msra.mxu0 0.0
    %144 = vmatprep.subr.mxu0 0.0
    %145 = vmatpush1.msra.mxu0 0.0
    %146 = vmatprep.subr.mxu0 0.0
    %147 = vmatpush1.msra.mxu0 0.0
    %148 = vmatprep.mubr.f32.mxu0 0.0
    %149 = vmatmul.mubr.f32.gmra.mrb[0].mxu0 %v82
    %v150 = vpop.f32.mrb[0].mxu0
    %v151 = vadd.f32 %v63, %v150
    %v152 = vpop.f32.mrb[0].mxu0
    %v153 = vadd.f32 %v67, %v152
    %154 = vdwg.mxu0
    %155 = vmatprep.subr.mxu0 %v41
    %156 = vmatpush1.msra.mxu0 %v40
    %157 = vmatprep.subr.mxu0 %v45
    %158 = vmatpush1.msra.mxu0 %v44
    %159 = vmatprep.subr.mxu0 0.0
    %160 = vmatpush1.msra.mxu0 0.0
    %161 = vmatprep.subr.mxu0 0.0
    %162 = vmatpush1.msra.mxu0 0.0
    %163 = vmatprep.subr.mxu0 0.0
    %164 = vmatpush1.msra.mxu0 0.0
    %165 = vmatprep.subr.mxu0 0.0
    %166 = vmatpush1.msra.mxu0 0.0
    %167 = vmatprep.subr.mxu0 0.0
    %168 = vmatpush1.msra.mxu0 0.0
    %169 = vmatprep.subr.mxu0 0.0
    %170 = vmatpush1.msra.mxu0 0.0
    %171 = vmatprep.subr.mxu0 0.0
    %172 = vmatpush1.msra.mxu0 0.0
    %173 = vmatprep.subr.mxu0 0.0
    %174 = vmatpush1.msra.mxu0 0.0
    %175 = vmatprep.subr.mxu0 0.0
    %176 = vmatpush1.msra.mxu0 0.0
    %177 = vmatprep.subr.mxu0 0.0
    %178 = vmatpush1.msra.mxu0 0.0
    %179 = vmatprep.subr.mxu0 0.0
    %180 = vmatpush1.msra.mxu0 0.0
    %181 = vmatprep.subr.mxu0 0.0
    %182 = vmatpush1.msra.mxu0 0.0
    %183 = vmatprep.subr.mxu0 0.0
    %184 = vmatpush1.msra.mxu0 0.0
    %185 = vmatprep.subr.mxu0 0.0
    %186 = vmatpush1.msra.mxu0 0.0
    %187 = vmatprep.subr.mxu0 0.0
    %188 = vmatpush1.msra.mxu0 0.0
    %189 = vmatprep.subr.mxu0 0.0
    %190 = vmatpush1.msra.mxu0 0.0
    %191 = vmatprep.subr.mxu0 0.0
    %192 = vmatpush1.msra.mxu0 0.0
    %193 = vmatprep.subr.mxu0 0.0
    %194 = vmatpush1.msra.mxu0 0.0
    %195 = vmatprep.subr.mxu0 0.0
    %196 = vmatpush1.msra.mxu0 0.0
    %197 = vmatprep.subr.mxu0 0.0
    %198 = vmatpush1.msra.mxu0 0.0
    %199 = vmatprep.subr.mxu0 0.0
    %200 = vmatpush1.msra.mxu0 0.0
    %201 = vmatprep.subr.mxu0 0.0
    %202 = vmatpush1.msra.mxu0 0.0
    %203 = vmatprep.subr.mxu0 0.0
    %204 = vmatpush1.msra.mxu0 0.0
    %205 = vmatprep.subr.mxu0 0.0
    %206 = vmatpush1.msra.mxu0 0.0
    %207 = vmatprep.subr.mxu0 0.0
    %208 = vmatpush1.msra.mxu0 0.0
    %209 = vmatprep.subr.mxu0 0.0
    %210 = vmatpush1.msra.mxu0 0.0
    %211 = vmatprep.subr.mxu0 0.0
    %212 = vmatpush1.msra.mxu0 0.0
    %213 = vmatprep.subr.mxu0 0.0
    %214 = vmatpush1.msra.mxu0 0.0
    %215 = vmatprep.subr.mxu0 0.0
    %216 = vmatpush1.msra.mxu0 0.0
    %217 = vmatprep.subr.mxu0 0.0
    %218 = vmatpush1.msra.mxu0 0.0
    %219 = vmatprep.mubr.f32.mxu0 0.0
    %220 = vmatmul.mubr.f32.gmra.mrb[0].mxu0 %v82
    %v221 = vpop.f32.mrb[0].mxu0
    %v222 = vadd.f32 %v71, %v221
    %v223 = vpop.f32.mrb[0].mxu0
    %v224 = vadd.f32 %v75, %v223
    %225 = vdwg.mxu0
    %v226 = vmax.f32 %v151, 0.0
    %v227 = vmax.f32 %v153, 0.0
    %v228 = vmax.f32 %v222, 0.0
    %v229 = vmax.f32 %v224, 0.0
    %v232 = vunpack.c.l.s4 1966171168
    %v233 = vunpack.c.0.s8 %v232
    %v234 = vlaneseq
    %v235 = vshrl.u32 %v234, 7
    %v236 = vsub.s32 %v233, %v235
    %v237 = vrot.slane %v226, %v236
    %v238 = vcombine.high %v237, %v237
    %v240 = vunpack.c.l.s4 1966171168
    %v241 = vunpack.c.0.s8 %v240
    %v242 = vlaneseq
    %v243 = vshrl.u32 %v242, 7
    %v244 = vsub.s32 %v241, %v243
    %v245 = vrot.slane %v237, %v244
    %v247 = vunpack.c.l.s4 1966171168
    %v248 = vunpack.c.0.s8 %v247
    %v249 = vlaneseq
    %v250 = vshrl.u32 %v249, 7
    %v251 = vsub.s32 %v248, %v250
    %v252 = vrot.slane %v238, %v251
    %vm255 = vcmask 253952
    %256 = vst.msk [vmem:[#allocation2] sm:$0x1] %vm255, %v245
    %257 = vst.msk [vmem:[#allocation2 + $0x10] sm:$0x1] %vm255, %v252
    %v258 = vlaneseq
    %v259 = vshrl.u32 %v258, 7
    %v260 = vsub.s32 0, %v259
    %v261 = vrot.slane %v245, %v260
    %v262 = vlaneseq
    %v263 = vshrl.u32 %v262, 7
    %v264 = vsub.s32 0, %v263
    %v265 = vrot.slane %v252, %v264
    %266 = vrot.lane.b32.xlu0 %v261, 96
    %v267 = vpop.permute.xlu0 %266
    %268 = vrot.lane.b32.xlu0 %v265, 96
    %v269 = vpop.permute.xlu0 %268
    %272 = vst.msk [vmem:[#allocation2 + $0x1] sm:$0x1] %vm255, %v267
    %273 = vst.msk [vmem:[#allocation2 + $0x11] sm:$0x1] %vm255, %v269
    %274 = vrot.lane.b32.xlu0 %v261, 64
    %v275 = vpop.permute.xlu0 %274
    %276 = vrot.lane.b32.xlu0 %v265, 64
    %v277 = vpop.permute.xlu0 %276
    %280 = vst.msk [vmem:[#allocation2 + $0x2] sm:$0x1] %vm255, %v275
    %281 = vst.msk [vmem:[#allocation2 + $0x12] sm:$0x1] %vm255, %v277
    %282 = vrot.lane.b32.xlu0 %v261, 32
    %v283 = vpop.permute.xlu0 %282
    %284 = vrot.lane.b32.xlu0 %v265, 32
    %v285 = vpop.permute.xlu0 %284
    %288 = vst.msk [vmem:[#allocation2 + $0x3] sm:$0x1] %vm255, %v283
    %289 = vst.msk [vmem:[#allocation2 + $0x13] sm:$0x1] %vm255, %v285
    %v292 = vunpack.c.l.s4 1966171168
    %v293 = vunpack.c.0.s8 %v292
    %v294 = vlaneseq
    %v295 = vshrl.u32 %v294, 7
    %v296 = vsub.s32 %v293, %v295
    %v297 = vrot.slane %v227, %v296
    %v298 = vcombine.high %v297, %v297
    %v300 = vunpack.c.l.s4 1966171168
    %v301 = vunpack.c.0.s8 %v300
    %v302 = vlaneseq
    %v303 = vshrl.u32 %v302, 7
    %v304 = vsub.s32 %v301, %v303
    %v305 = vrot.slane %v297, %v304
    %v307 = vunpack.c.l.s4 1966171168
    %v308 = vunpack.c.0.s8 %v307
    %v309 = vlaneseq
    %v310 = vshrl.u32 %v309, 7
    %v311 = vsub.s32 %v308, %v310
    %v312 = vrot.slane %v298, %v311
    %315 = vst.msk [vmem:[#allocation2 + $0x4] sm:$0x1] %vm255, %v305
    %316 = vst.msk [vmem:[#allocation2 + $0x14] sm:$0x1] %vm255, %v312
    %v317 = vlaneseq
    %v318 = vshrl.u32 %v317, 7
    %v319 = vsub.s32 0, %v318
    %v320 = vrot.slane %v305, %v319
    %v321 = vlaneseq
    %v322 = vshrl.u32 %v321, 7
    %v323 = vsub.s32 0, %v322
    %v324 = vrot.slane %v312, %v323
    %325 = vrot.lane.b32.xlu0 %v320, 96
    %v326 = vpop.permute.xlu0 %325
    %327 = vrot.lane.b32.xlu0 %v324, 96
    %v328 = vpop.permute.xlu0 %327
    %331 = vst.msk [vmem:[#allocation2 + $0x5] sm:$0x1] %vm255, %v326
    %332 = vst.msk [vmem:[#allocation2 + $0x15] sm:$0x1] %vm255, %v328
    %333 = vrot.lane.b32.xlu0 %v320, 64
    %v334 = vpop.permute.xlu0 %333
    %335 = vrot.lane.b32.xlu0 %v324, 64
    %v336 = vpop.permute.xlu0 %335
    %339 = vst.msk [vmem:[#allocation2 + $0x6] sm:$0x1] %vm255, %v334
    %340 = vst.msk [vmem:[#allocation2 + $0x16] sm:$0x1] %vm255, %v336
    %341 = vrot.lane.b32.xlu0 %v320, 32
    %v342 = vpop.permute.xlu0 %341
    %343 = vrot.lane.b32.xlu0 %v324, 32
    %v344 = vpop.permute.xlu0 %343
    %347 = vst.msk [vmem:[#allocation2 + $0x7] sm:$0x1] %vm255, %v342
    %348 = vst.msk [vmem:[#allocation2 + $0x17] sm:$0x1] %vm255, %v344
    %v351 = vunpack.c.l.s4 1966171168
    %v352 = vunpack.c.0.s8 %v351
    %v353 = vlaneseq
    %v354 = vshrl.u32 %v353, 7
    %v355 = vsub.s32 %v352, %v354
    %v356 = vrot.slane %v228, %v355
    %v357 = vcombine.high %v356, %v356
    %v359 = vunpack.c.l.s4 1966171168
    %v360 = vunpack.c.0.s8 %v359
    %v361 = vlaneseq
    %v362 = vshrl.u32 %v361, 7
    %v363 = vsub.s32 %v360, %v362
    %v364 = vrot.slane %v356, %v363
    %v366 = vunpack.c.l.s4 1966171168
    %v367 = vunpack.c.0.s8 %v366
    %v368 = vlaneseq
    %v369 = vshrl.u32 %v368, 7
    %v370 = vsub.s32 %v367, %v369
    %v371 = vrot.slane %v357, %v370
    %374 = vst.msk [vmem:[#allocation2 + $0x8] sm:$0x1] %vm255, %v364
    %375 = vst.msk [vmem:[#allocation2 + $0x18] sm:$0x1] %vm255, %v371
    %v376 = vlaneseq
    %v377 = vshrl.u32 %v376, 7
    %v378 = vsub.s32 0, %v377
    %v379 = vrot.slane %v364, %v378
    %v380 = vlaneseq
    %v381 = vshrl.u32 %v380, 7
    %v382 = vsub.s32 0, %v381
    %v383 = vrot.slane %v371, %v382
    %384 = vrot.lane.b32.xlu0 %v379, 96
    %v385 = vpop.permute.xlu0 %384
    %386 = vrot.lane.b32.xlu0 %v383, 96
    %v387 = vpop.permute.xlu0 %386
    %390 = vst.msk [vmem:[#allocation2 + $0x9] sm:$0x1] %vm255, %v385
    %391 = vst.msk [vmem:[#allocation2 + $0x19] sm:$0x1] %vm255, %v387
    %392 = vrot.lane.b32.xlu0 %v379, 64
    %v393 = vpop.permute.xlu0 %392
    %394 = vrot.lane.b32.xlu0 %v383, 64
    %v395 = vpop.permute.xlu0 %394
    %398 = vst.msk [vmem:[#allocation2 + $0xa] sm:$0x1] %vm255, %v393
    %399 = vst.msk [vmem:[#allocation2 + $0x1a] sm:$0x1] %vm255, %v395
    %400 = vrot.lane.b32.xlu0 %v379, 32
    %v401 = vpop.permute.xlu0 %400
    %402 = vrot.lane.b32.xlu0 %v383, 32
    %v403 = vpop.permute.xlu0 %402
    %406 = vst.msk [vmem:[#allocation2 + $0xb] sm:$0x1] %vm255, %v401
    %407 = vst.msk [vmem:[#allocation2 + $0x1b] sm:$0x1] %vm255, %v403
    %v410 = vunpack.c.l.s4 1966171168
    %v411 = vunpack.c.0.s8 %v410
    %v412 = vlaneseq
    %v413 = vshrl.u32 %v412, 7
    %v414 = vsub.s32 %v411, %v413
    %v415 = vrot.slane %v229, %v414
    %v416 = vcombine.high %v415, %v415
    %v418 = vunpack.c.l.s4 1966171168
    %v419 = vunpack.c.0.s8 %v418
    %v420 = vlaneseq
    %v421 = vshrl.u32 %v420, 7
    %v422 = vsub.s32 %v419, %v421
    %v423 = vrot.slane %v415, %v422
    %v425 = vunpack.c.l.s4 1966171168
    %v426 = vunpack.c.0.s8 %v425
    %v427 = vlaneseq
    %v428 = vshrl.u32 %v427, 7
    %v429 = vsub.s32 %v426, %v428
    %v430 = vrot.slane %v416, %v429
    %433 = vst.msk [vmem:[#allocation2 + $0xc] sm:$0x1] %vm255, %v423
    %434 = vst.msk [vmem:[#allocation2 + $0x1c] sm:$0x1] %vm255, %v430
    %v435 = vlaneseq
    %v436 = vshrl.u32 %v435, 7
    %v437 = vsub.s32 0, %v436
    %v438 = vrot.slane %v423, %v437
    %v439 = vlaneseq
    %v440 = vshrl.u32 %v439, 7
    %v441 = vsub.s32 0, %v440
    %v442 = vrot.slane %v430, %v441
    %443 = vrot.lane.b32.xlu0 %v438, 96
    %v444 = vpop.permute.xlu0 %443
    %445 = vrot.lane.b32.xlu0 %v442, 96
    %v446 = vpop.permute.xlu0 %445
    %449 = vst.msk [vmem:[#allocation2 + $0xd] sm:$0x1] %vm255, %v444
    %450 = vst.msk [vmem:[#allocation2 + $0x1d] sm:$0x1] %vm255, %v446
    %451 = vrot.lane.b32.xlu0 %v438, 64
    %v452 = vpop.permute.xlu0 %451
    %453 = vrot.lane.b32.xlu0 %v442, 64
    %v454 = vpop.permute.xlu0 %453
    %457 = vst.msk [vmem:[#allocation2 + $0xe] sm:$0x1] %vm255, %v452
    %458 = vst.msk [vmem:[#allocation2 + $0x1e] sm:$0x1] %vm255, %v454
    %459 = vrot.lane.b32.xlu0 %v438, 32
    %v460 = vpop.permute.xlu0 %459
    %461 = vrot.lane.b32.xlu0 %v442, 32
    %v462 = vpop.permute.xlu0 %461
    %465 = vst.msk [vmem:[#allocation2 + $0xf] sm:$0x1] %vm255, %v460
    %466 = vst.msk [vmem:[#allocation2 + $0x1f] sm:$0x1] %vm255, %v462
    %v467 = vld [vmem:[#allocation2] sm:$0xff]
    %v468 = vld [vmem:[#allocation2 + $0x8] sm:$0xff]
    %s469 = scalar_lea.vmem [#allocation2], 16
    %v470 = vld [vmem:[%s469] sm:$0xff]
    %v471 = vld [vmem:[%s469 + $0x8] sm:$0xff]
    %vm477 = vcmask 1046528
    %v478 = vrot.slane %v48, 1
    %v479 = vrot.slane %v49, 1
    %v480 = vsel %vm477, %v478, %v479
    %v481 = vrot.slane %v50, 1
    %v482 = vsel %vm477, %v479, %v481
    %v483 = vrot.slane %v51, 1
    %v484 = vsel %vm477, %v481, %v483
    %v485 = vrot.slane %v52, 1
    %v486 = vsel %vm477, %v483, %v485
    %vm491 = vcmask 261120
    %v493 = vsel %vm491, %v467, 0
    %v496 = vsel %vm491, %v468, 0
    %v499 = vsel %vm491, %v470, 0
    %v502 = vsel %vm491, %v471, 0
    %504 = vmatprep.subr.mxu0 0.0
    %505 = vmatpush1.msra.mxu0 %v480
    %506 = vmatprep.subr.mxu0 0.0
    %507 = vmatpush1.msra.mxu0 %v482
    %508 = vmatprep.subr.mxu0 0.0
    %509 = vmatpush1.msra.mxu0 %v484
    %510 = vmatprep.subr.mxu0 0.0
    %511 = vmatpush1.msra.mxu0 %v486
    %512 = vmatprep.subr.mxu0 0.0
    %513 = vmatpush1.msra.mxu0 0.0
    %514 = vmatprep.subr.mxu0 0.0
    %515 = vmatpush1.msra.mxu0 0.0
    %516 = vmatprep.subr.mxu0 0.0
    %517 = vmatpush1.msra.mxu0 0.0
    %518 = vmatprep.subr.mxu0 0.0
    %519 = vmatpush1.msra.mxu0 0.0
    %520 = vmatprep.subr.mxu0 0.0
    %521 = vmatpush1.msra.mxu0 0.0
    %522 = vmatprep.subr.mxu0 0.0
    %523 = vmatpush1.msra.mxu0 0.0
    %524 = vmatprep.subr.mxu0 0.0
    %525 = vmatpush1.msra.mxu0 0.0
    %526 = vmatprep.subr.mxu0 0.0
    %527 = vmatpush1.msra.mxu0 0.0
    %528 = vmatprep.subr.mxu0 0.0
    %529 = vmatpush1.msra.mxu0 0.0
    %530 = vmatprep.subr.mxu0 0.0
    %531 = vmatpush1.msra.mxu0 0.0
    %532 = vmatprep.subr.mxu0 0.0
    %533 = vmatpush1.msra.mxu0 0.0
    %534 = vmatprep.subr.mxu0 0.0
    %535 = vmatpush1.msra.mxu0 0.0
    %536 = vmatprep.subr.mxu0 0.0
    %537 = vmatpush1.msra.mxu0 0.0
    %538 = vmatprep.subr.mxu0 0.0
    %539 = vmatpush1.msra.mxu0 0.0
    %540 = vmatprep.subr.mxu0 0.0
    %541 = vmatpush1.msra.mxu0 0.0
    %542 = vmatprep.subr.mxu0 0.0
    %543 = vmatpush1.msra.mxu0 0.0
    %544 = vmatprep.subr.mxu0 0.0
    %545 = vmatpush1.msra.mxu0 0.0
    %546 = vmatprep.subr.mxu0 0.0
    %547 = vmatpush1.msra.mxu0 0.0
    %548 = vmatprep.subr.mxu0 0.0
    %549 = vmatpush1.msra.mxu0 0.0
    %550 = vmatprep.subr.mxu0 0.0
    %551 = vmatpush1.msra.mxu0 0.0
    %552 = vmatprep.subr.mxu0 0.0
    %553 = vmatpush1.msra.mxu0 0.0
    %554 = vmatprep.subr.mxu0 0.0
    %555 = vmatpush1.msra.mxu0 0.0
    %556 = vmatprep.subr.mxu0 0.0
    %557 = vmatpush1.msra.mxu0 0.0
    %558 = vmatprep.subr.mxu0 0.0
    %559 = vmatpush1.msra.mxu0 0.0
    %560 = vmatprep.subr.mxu0 0.0
    %561 = vmatpush1.msra.mxu0 0.0
    %562 = vmatprep.subr.mxu0 0.0
    %563 = vmatpush1.msra.mxu0 0.0
    %564 = vmatprep.subr.mxu0 0.0
    %565 = vmatpush1.msra.mxu0 0.0
    %566 = vmatprep.subr.mxu0 0.0
    %567 = vmatpush1.msra.mxu0 0.0
    %568 = vmatprep.mubr.f32.mxu0 0.0
    %569 = vmatmul.mubr.f32.gmra.mrb[0].mxu0 %v493
    %v570 = vpop.f32.mrb[0].mxu0
    %v571 = vadd.f32 %v53, %v570
    %v572 = vpop.f32.mrb[0].mxu0
    %573 = vmatprep.mubr.f32.mxu0 0.0
    %574 = vmatmul.mubr.f32.gmra.mrb[0].mxu0 %v496
    %v575 = vpop.f32.mrb[0].mxu0
    %v576 = vadd.f32 %v53, %v575
    %v577 = vpop.f32.mrb[0].mxu0
    %578 = vmatprep.mubr.f32.mxu0 0.0
    %579 = vmatmul.mubr.f32.gmra.mrb[0].mxu0 %v499
    %v580 = vpop.f32.mrb[0].mxu0
    %v581 = vadd.f32 %v53, %v580
    %v582 = vpop.f32.mrb[0].mxu0
    %583 = vmatprep.mubr.f32.mxu0 0.0
    %584 = vmatmul.mubr.f32.gmra.mrb[0].mxu0 %v502
    %v585 = vpop.f32.mrb[0].mxu0
    %v586 = vadd.f32 %v53, %v585
    %v587 = vpop.f32.mrb[0].mxu0
    %588 = vdwg.mxu0
    %591 = vrot.lane.b32.xlu0 %v581, 64
    %v592 = vpop.permute.xlu0 %591
    %593 = vrot.lane.b32.xlu0 %v586, 64
    %v594 = vpop.permute.xlu0 %593
    %vm597 = vcmask 523264
    %v598 = vsel %vm597, %v571, %v592
    %v599 = vsel %vm597, %v576, %v594
    %v600 = vlaneseq
    %v601 = vand.u32 %v600, 127
    %v602 = vand.u32 %v601, 63
    %vm603 = vcmp.eq.s32.totalorder %v602, 0
    %vm604 = vcmp.eq.s32.totalorder %v602, 63
    %607 = vrot.lane.b32.xlu0 %v598, 1
    %v608 = vpop.permute.xlu0 %607
    %609 = vrot.lane.b32.xlu0 %v599, 1
    %v610 = vpop.permute.xlu0 %609
    %vm613 = vcmask 7168
    %v614 = vsel %vm613, 0.0, %v608
    %v615 = vsel %vm613, 0.0, %v610
    %616 = vrot.lane.b32.xlu0 %v598, 127
    %v617 = vpop.permute.xlu0 %616
    %618 = vrot.lane.b32.xlu0 %v599, 127
    %v619 = vpop.permute.xlu0 %618
    %vm622 = vcmask 1039360
    %v623 = vsel %vm622, %v617, 0.0
    %v624 = vsel %vm622, %v619, 0.0
    %v625 = vsel %vm603, 0.0, %v614
    %v626 = vsel %vm603, 0.0, %v615
    %v627 = vsel %vm604, 0.0, %v623
    %v628 = vsel %vm604, 0.0, %v624
    %630 = vset.pattern.permute.xlu0 48
    %631 = vperm.xlu0 %630, %v54
    %v632 = vpop.permute.xlu0 %631
    %634 = vset.pattern.permute.xlu0 48
    %635 = vperm.xlu0 %634, %v55
    %v636 = vpop.permute.xlu0 %635
    %638 = vset.pattern.permute.xlu0 48
    %639 = vperm.xlu0 %638, %v56
    %v640 = vpop.permute.xlu0 %639
    %vm641 = vcmask 1045504
    %v642 = vrot.slane %v54, 2
    %v643 = vrot.slane %v55, 2
    %v644 = vsel %vm641, %v642, %v643
    %v645 = vrot.slane %v56, 2
    %v646 = vsel %vm641, %v643, %v645
    %v647 = vrot.slane %v632, 2
    %v648 = vrot.slane %v636, 2
    %v649 = vsel %vm641, %v647, %v648
    %v650 = vrot.slane %v640, 2
    %v651 = vsel %vm641, %v648, %v650
    %vm654 = vcmask 392192
    %v655 = vsel %vm654, %v644, 0
    %v657 = vsel %vm654, %v646, 0
    %659 = vmatprep.subr.mxu0 0.0
    %660 = vmatpush1.msra.mxu0 %v625
    %661 = vmatprep.subr.mxu0 0.0
    %662 = vmatpush1.msra.mxu0 %v626
    %663 = vmatprep.subr.mxu0 0.0
    %664 = vmatpush1.msra.mxu0 %v598
    %665 = vmatprep.subr.mxu0 0.0
    %666 = vmatpush1.msra.mxu0 %v599
    %667 = vmatprep.subr.mxu0 0.0
    %668 = vmatpush1.msra.mxu0 %v627
    %669 = vmatprep.subr.mxu0 0.0
    %670 = vmatpush1.msra.mxu0 %v628
    %671 = vmatprep.subr.mxu0 0.0
    %672 = vmatpush1.msra.mxu0 0.0
    %673 = vmatprep.subr.mxu0 0.0
    %674 = vmatpush1.msra.mxu0 0.0
    %675 = vmatprep.subr.mxu0 0.0
    %676 = vmatpush1.msra.mxu0 0.0
    %677 = vmatprep.subr.mxu0 0.0
    %678 = vmatpush1.msra.mxu0 0.0
    %679 = vmatprep.subr.mxu0 0.0
    %680 = vmatpush1.msra.mxu0 0.0
    %681 = vmatprep.subr.mxu0 0.0
    %682 = vmatpush1.msra.mxu0 0.0
    %683 = vmatprep.subr.mxu0 0.0
    %684 = vmatpush1.msra.mxu0 0.0
    %685 = vmatprep.subr.mxu0 0.0
    %686 = vmatpush1.msra.mxu0 0.0
    %687 = vmatprep.subr.mxu0 0.0
    %688 = vmatpush1.msra.mxu0 0.0
    %689 = vmatprep.subr.mxu0 0.0
    %690 = vmatpush1.msra.mxu0 0.0
    %691 = vmatprep.subr.mxu0 0.0
    %692 = vmatpush1.msra.mxu0 0.0
    %693 = vmatprep.subr.mxu0 0.0
    %694 = vmatpush1.msra.mxu0 0.0
    %695 = vmatprep.subr.mxu0 0.0
    %696 = vmatpush1.msra.mxu0 0.0
    %697 = vmatprep.subr.mxu0 0.0
    %698 = vmatpush1.msra.mxu0 0.0
    %699 = vmatprep.subr.mxu0 0.0
    %700 = vmatpush1.msra.mxu0 0.0
    %701 = vmatprep.subr.mxu0 0.0
    %702 = vmatpush1.msra.mxu0 0.0
    %703 = vmatprep.subr.mxu0 0.0
    %704 = vmatpush1.msra.mxu0 0.0
    %705 = vmatprep.subr.mxu0 0.0
    %706 = vmatpush1.msra.mxu0 0.0
    %707 = vmatprep.subr.mxu0 0.0
    %708 = vmatpush1.msra.mxu0 0.0
    %709 = vmatprep.subr.mxu0 0.0
    %710 = vmatpush1.msra.mxu0 0.0
    %711 = vmatprep.subr.mxu0 0.0
    %712 = vmatpush1.msra.mxu0 0.0
    %713 = vmatprep.subr.mxu0 0.0
    %714 = vmatpush1.msra.mxu0 0.0
    %715 = vmatprep.subr.mxu0 0.0
    %716 = vmatpush1.msra.mxu0 0.0
    %717 = vmatprep.subr.mxu0 0.0
    %718 = vmatpush1.msra.mxu0 0.0
    %719 = vmatprep.subr.mxu0 0.0
    %720 = vmatpush1.msra.mxu0 0.0
    %721 = vmatprep.subr.mxu0 0.0
    %722 = vmatpush1.msra.mxu0 0.0
    %723 = vmatprep.mubr.f32.mxu0 0.0
    %724 = vmatmul.mubr.f32.gmra.mrb[0].mxu0 %v655
    %v725 = vpop.f32.mrb[0].mxu0
    %v726 = vadd.f32 %v649, %v725
    %v727 = vpop.f32.mrb[0].mxu0
    %728 = vmatprep.mubr.f32.mxu0 0.0
    %729 = vmatmul.mubr.f32.gmra.mrb[0].mxu0 %v657
    %v730 = vpop.f32.mrb[0].mxu0
    %v731 = vadd.f32 %v651, %v730
    %v732 = vpop.f32.mrb[0].mxu0
    %733 = vdwg.mxu0
    %v734 = vmax.f32 %v726, 0.0
    %v735 = vmax.f32 %v731, 0.0
    %738 = vrot.lane.b32.xlu0 %v734, 1
    %v739 = vpop.permute.xlu0 %738
    %740 = vrot.lane.b32.xlu0 %v735, 1
    %v741 = vpop.permute.xlu0 %740
    %v744 = vsel %vm613, 0.0, %v739
    %v745 = vsel %vm613, 0.0, %v741
    %746 = vrot.lane.b32.xlu0 %v734, 127
    %v747 = vpop.permute.xlu0 %746
    %748 = vrot.lane.b32.xlu0 %v735, 127
    %v749 = vpop.permute.xlu0 %748
    %v752 = vsel %vm622, %v747, 0.0
    %v753 = vsel %vm622, %v749, 0.0
    %v754 = vsel %vm603, 0.0, %v744
    %v755 = vsel %vm603, 0.0, %v745
    %v756 = vsel %vm604, 0.0, %v752
    %v757 = vsel %vm604, 0.0, %v753
    %759 = vset.pattern.permute.xlu0 48
    %760 = vperm.xlu0 %759, %v57
    %v761 = vpop.permute.xlu0 %760
    %v762 = vrot.slane %v57, 2
    %v763 = vrot.slane %v761, 2
    %v765 = vsel %vm654, %v762, 0
    %767 = vmatprep.subr.mxu0 0.0
    %768 = vmatpush1.msra.mxu0 %v754
    %769 = vmatprep.subr.mxu0 0.0
    %770 = vmatpush1.msra.mxu0 %v755
    %771 = vmatprep.subr.mxu0 0.0
    %772 = vmatpush1.msra.mxu0 %v734
    %773 = vmatprep.subr.mxu0 0.0
    %774 = vmatpush1.msra.mxu0 %v735
    %775 = vmatprep.subr.mxu0 0.0
    %776 = vmatpush1.msra.mxu0 %v756
    %777 = vmatprep.subr.mxu0 0.0
    %778 = vmatpush1.msra.mxu0 %v757
    %779 = vmatprep.subr.mxu0 0.0
    %780 = vmatpush1.msra.mxu0 0.0
    %781 = vmatprep.subr.mxu0 0.0
    %782 = vmatpush1.msra.mxu0 0.0
    %783 = vmatprep.subr.mxu0 0.0
    %784 = vmatpush1.msra.mxu0 0.0
    %785 = vmatprep.subr.mxu0 0.0
    %786 = vmatpush1.msra.mxu0 0.0
    %787 = vmatprep.subr.mxu0 0.0
    %788 = vmatpush1.msra.mxu0 0.0
    %789 = vmatprep.subr.mxu0 0.0
    %790 = vmatpush1.msra.mxu0 0.0
    %791 = vmatprep.subr.mxu0 0.0
    %792 = vmatpush1.msra.mxu0 0.0
    %793 = vmatprep.subr.mxu0 0.0
    %794 = vmatpush1.msra.mxu0 0.0
    %795 = vmatprep.subr.mxu0 0.0
    %796 = vmatpush1.msra.mxu0 0.0
    %797 = vmatprep.subr.mxu0 0.0
    %798 = vmatpush1.msra.mxu0 0.0
    %799 = vmatprep.subr.mxu0 0.0
    %800 = vmatpush1.msra.mxu0 0.0
    %801 = vmatprep.subr.mxu0 0.0
    %802 = vmatpush1.msra.mxu0 0.0
    %803 = vmatprep.subr.mxu0 0.0
    %804 = vmatpush1.msra.mxu0 0.0
    %805 = vmatprep.subr.mxu0 0.0
    %806 = vmatpush1.msra.mxu0 0.0
    %807 = vmatprep.subr.mxu0 0.0
    %808 = vmatpush1.msra.mxu0 0.0
    %809 = vmatprep.subr.mxu0 0.0
    %810 = vmatpush1.msra.mxu0 0.0
    %811 = vmatprep.subr.mxu0 0.0
    %812 = vmatpush1.msra.mxu0 0.0
    %813 = vmatprep.subr.mxu0 0.0
    %814 = vmatpush1.msra.mxu0 0.0
    %815 = vmatprep.subr.mxu0 0.0
    %816 = vmatpush1.msra.mxu0 0.0
    %817 = vmatprep.subr.mxu0 0.0
    %818 = vmatpush1.msra.mxu0 0.0
    %819 = vmatprep.subr.mxu0 0.0
    %820 = vmatpush1.msra.mxu0 0.0
    %821 = vmatprep.subr.mxu0 0.0
    %822 = vmatpush1.msra.mxu0 0.0
    %823 = vmatprep.subr.mxu0 0.0
    %824 = vmatpush1.msra.mxu0 0.0
    %825 = vmatprep.subr.mxu0 0.0
    %826 = vmatpush1.msra.mxu0 0.0
    %827 = vmatprep.subr.mxu0 0.0
    %828 = vmatpush1.msra.mxu0 0.0
    %829 = vmatprep.subr.mxu0 0.0
    %830 = vmatpush1.msra.mxu0 0.0
    %831 = vmatprep.mubr.f32.mxu0 0.0
    %832 = vmatmul.mubr.f32.gmra.mrb[0].mxu0 %v765
    %v833 = vpop.f32.mrb[0].mxu0
    %v834 = vadd.f32 %v763, %v833
    %v835 = vpop.f32.mrb[0].mxu0
    %836 = vdwg.mxu0
    %837 = vst [vmem:[#allocation8] sm:$0x7] %v834
    // Predicated region
    $region18: #{tpu_custom_call.1} parent=1 // pred_check
      _
    $region19: #{tpu_custom_call.1} parent=1 // pred_check_branch
      %839 = sbr.rel (0) target = $region21
    $region20: #{tpu_custom_call.1} parent=1 // pred_region
      %s841 = ssub.s32 64, 64
      %842 = vsyncadd [#allocation5], %s841
      %s844 = sshll.u32 [#allocation8], 4
      %s845 = int_to_ptr.vmem [resolvable:$true] %s844
      %847 = dma.vmem_to_hbm [thread:$0]  %s845, 64, %s2, [#allocation5]
    $region21: #{tpu_custom_call.1} parent=1 // pred_fallthru
      _
    // Predicated region
    $region22: #{tpu_custom_call.1} parent=1 // pred_check
      _
    $region23: #{tpu_custom_call.1} parent=1 // pred_check_branch
      %849 = sbr.rel (0) target = $region25
    $region24: #{tpu_custom_call.1} parent=1 // pred_region
      %850 = dma.done [#allocation5], 64
    $region25: #{tpu_custom_call.1} parent=1 // pred_fallthru
      _
    %851 = vsyncpa [#allocation4], 1
    %852 = vsyncpa [#allocation7], 1
    %853 = vsyncpa [#allocation5], 1

</llo_original>
